<compile_context>
chip_gen: v7x
topology: tpu7x:2x2x1
jax: 0.10.0
libtpu: 0.0.40
codegen_flags: <defaults>
</compile_context>

<pallas_src>
import functools

import jax
import jax.numpy as jnp
from jax import lax
from jax.experimental import pallas as pl
from jax.experimental.pallas import tpu as pltpu

MARGIN = 1.5

_SUBLANE = 8
_LANE = 128
# ~2 MiB of f32 (1 MiB of bf16) per streamed neg block; double-buffered this
# keeps live VMEM well under the 32 MiB scoped default on every generation
# while staying near the HBM roofline on v5e/v6e.
_TARGET_BLOCK_ELEMS = 512 * 1024
_VMEM_LIMIT_BYTES = 32 * 1024 * 1024   # explicit budget, <= v7x scoped default


def _round_up(x, m):
    return (x + m - 1) // m * m


def _low_precision_compute_ok():
    """bf16/f16 VALU exists on v6e and newer; keep f32 math on v5 and older."""
    try:
        kind = jax.devices()[0].device_kind.lower()
    except Exception:
        return False
    return not any(tag in kind for tag in ("v2", "v3", "v4", "v5"))


def _choose_tiles(rows, lane):
    """Element-budgeted (row_tile, lane_tile) for the neg block."""
    tl = lane
    if lane % _LANE == 0 and _SUBLANE * lane > _TARGET_BLOCK_ELEMS:
        # Pathologically wide lane axis: tile it with the largest
        # multiple-of-128 divisor that keeps an 8-row block within budget.
        max_tl = max(_LANE, _TARGET_BLOCK_ELEMS // _SUBLANE)
        tl = _LANE
        cand = _LANE
        while cand <= lane and cand <= max_tl:
            if lane % cand == 0:
                tl = cand
            cand += _LANE
    tm = max(_SUBLANE, (_TARGET_BLOCK_ELEMS // tl) // _SUBLANE * _SUBLANE)
    tm = min(tm, _round_up(rows, _SUBLANE))
    return tm, tl


def _bpr_loss_kernel(pos_ref, neg_ref, out_ref, acc_ref, *,
                     margin, inv_n, rows, tm, gr, tiles_per_core,
                     has_ghost, need_row_mask, compute_dtype):
    c = pl.program_id(0)
    i = pl.program_id(1)
    j = pl.program_id(2)

    @pl.when(jnp.logical_and(i == 0, j == 0))
    def _init():
        acc_ref[...] = jnp.zeros(acc_ref.shape, jnp.float32)

    # Stream blocks in native dtype; hinge math in compute_dtype.
    neg = neg_ref[...].astype(compute_dtype)          # (tm, tl)
    pos = pos_ref[...].astype(compute_dtype)          # (1,tl) / (tm,1) / (tm,tl)
    mp = margin - pos                                  # tiny; hoisted off per-vreg path
    hinge = jnp.maximum(mp + neg, 0.0)                 # == max(margin-(pos-neg), 0)
    tl = hinge.shape[-1]

    def fold(x):
        # Layout-preserving sublane fold: (tm, tl) -> (tm//8, 8, tl) -> (8, tl).
        return x.reshape(tm // _SUBLANE, _SUBLANE, tl).astype(jnp.float32).sum(axis=0)

    tile = c * tiles_per_core + i                      # global row-tile index
    row_start = tile * tm
    valid = (tile < gr) if has_ghost else None         # ghost tiles contribute nothing

    if need_row_mask:
        is_tail = row_start + tm > rows                # only the boundary tile
        full_cond = jnp.logical_not(is_tail)
        tail_cond = is_tail
        if valid is not None:
            full_cond = jnp.logical_and(valid, full_cond)
            tail_cond = jnp.logical_and(valid, tail_cond)

        folded = fold(hinge)

        @pl.when(full_cond)
        def _acc_full():
            acc_ref[...] += folded

        @pl.when(tail_cond)
        def _acc_tail():
            row_ids = row_start + lax.broadcasted_iota(jnp.int32, hinge.shape, 0)
            masked = jnp.where(row_ids < rows, hinge, jnp.zeros_like(hinge))
            acc_ref[...] += fold(masked)
    else:
        folded = fold(hinge)
        if valid is not None:
            @pl.when(valid)
            def _acc():
                acc_ref[...] += folded
        else:
            acc_ref[...] += folded

    @pl.when(jnp.logical_and(i == pl.num_programs(1) - 1,
                             j == pl.num_programs(2) - 1))
    def _finalize():
        # One cross-lane reduce per core; partial is already scaled by 1/N.
        partial = jnp.sum(acc_ref[...]) * inv_n
        out_ref[...] = jnp.broadcast_to(partial, out_ref.shape).astype(jnp.float32)


def bpr_drug_loss(pos_scores, neg_scores, margin=MARGIN, row_tile=None):
    """JAX/Pallas equivalent of BPRDrugLoss.forward (returns scalar mean loss)."""
    pos = jnp.asarray(pos_scores)
    neg = jnp.asarray(neg_scores)

    # --- torch glue: unsqueeze(1) when ndims match, then expand_as(neg). ---
    if pos.ndim == neg.ndim:
        pos = jnp.expand_dims(pos, 1)

    lane = neg.shape[-1]
    rows = int(neg.size // max(1, lane))
    neg2 = neg.reshape(rows, lane)

    # Right-align pos against neg (broadcast alignment), then classify.
    if pos.ndim < neg.ndim:
        pos = pos.reshape((1,) * (neg.ndim - pos.ndim) + pos.shape)

    lead_ones = all(d == 1 for d in pos.shape[:-1])
    lead_match = pos.shape[:-1] == neg.shape[:-1]
    plast = pos.shape[-1]

    if lead_ones and plast in (1, lane):
        pos2 = pos.reshape(1, plast)                   # row broadcast (common case)
    elif lead_match and plast == 1:
        pos2 = pos.reshape(rows, 1)                    # lane broadcast, no HBM expand
    elif lead_match and plast == lane:
        pos2 = pos.reshape(rows, lane)                 # already full size
    else:
        # Rare mixed broadcast: materialize the expand.
        pos2 = jnp.broadcast_to(pos, neg.shape).reshape(rows, lane)

    tm, tl = _choose_tiles(rows, lane)
    if row_tile is not None:                           # tuning/test override (8-aligned)
        tm = min(max(_SUBLANE, _round_up(int(row_tile), _SUBLANE)),
                 _round_up(rows, _SUBLANE))

    gr = pl.cdiv(rows, tm)                             # row tiles
    gl = max(1, lane // tl)                            # lane tiles (tl divides lane)
    num_cores = 2 if gr >= 2 else 1                    # 2-TC split on v7x; loop elsewhere
    tiles_per_core = pl.cdiv(gr, num_cores)
    has_ghost = tiles_per_core * num_cores != gr
    need_row_mask = (rows % tm) != 0

    in_dtype = jnp.result_type(pos2.dtype, neg2.dtype)
    if (in_dtype in (jnp.dtype(jnp.bfloat16), jnp.dtype(jnp.float16))
            and _low_precision_compute_ok()):
        compute_dtype = in_dtype
    else:
        compute_dtype = jnp.float32

    def _row_block(c, i):
        t = c * tiles_per_core + i
        if has_ghost:
            t = jnp.minimum(t, gr - 1)                 # keep ghost-tile DMA in range
        return t

    p_rows, p_cols = pos2.shape
    pb_r = 1 if p_rows == 1 else tm
    pb_c = 1 if p_cols == 1 else tl

    def _pos_index(c, i, j):
        return (0 if p_rows == 1 else _row_block(c, i),
                0 if p_cols == 1 else j)

    pos_spec = pl.BlockSpec((pb_r, pb_c), _pos_index)
    neg_spec = pl.BlockSpec((tm, tl), lambda c, i, j: (_row_block(c, i), j))
    out_spec = pl.BlockSpec((1, _SUBLANE, _LANE), lambda c, i, j: (c, 0, 0))

    n_elems = rows * lane
    kernel = functools.partial(
        _bpr_loss_kernel,
        margin=float(margin),
        inv_n=1.0 / float(n_elems),
        rows=rows, tm=tm, gr=gr, tiles_per_core=tiles_per_core,
        has_ghost=has_ghost, need_row_mask=need_row_mask,
        compute_dtype=compute_dtype,
    )

    out = pl.pallas_call(
        kernel,
        out_shape=jax.ShapeDtypeStruct((num_cores, _SUBLANE, _LANE), jnp.float32),
        grid=(num_cores, tiles_per_core, gl),
        in_specs=[pos_spec, neg_spec],
        out_specs=out_spec,
        scratch_shapes=[pltpu.VMEM((_SUBLANE, tl), jnp.float32)],
        compiler_params=pltpu.CompilerParams(
            dimension_semantics=("parallel", "arbitrary", "arbitrary"),
            vmem_limit_bytes=_VMEM_LIMIT_BYTES),
    )(pos2, neg2)

    # Each core's (8,128) block holds its (already 1/N-scaled) partial sum.
    return out[:, 0, 0].sum()


def _reference(pos_scores, neg_scores, margin=MARGIN):
    pos = jnp.asarray(pos_scores, jnp.float32)
    neg = jnp.asarray(neg_scores, jnp.float32)
    if pos.ndim == neg.ndim:
        pos = jnp.expand_dims(pos, 1)
    pos = jnp.broadcast_to(pos, neg.shape)
    return jnp.mean(jnp.maximum(margin - (pos - neg), 0.0))


if __name__ == "__main__":
    key = jax.random.PRNGKey(0)
    keys = jax.random.split(key, 8)

    # Case 1: pos (B,), neg (K, B) -- pos broadcasts over the leading axis.
    B, K = 128, 8
    pos1 = jax.random.normal(keys[0], (B,), dtype=jnp.float32)
    neg1 = jax.random.normal(keys[1], (K, B), dtype=jnp.float32)
    out1 = jax.block_until_ready(bpr_drug_loss(pos1, neg1))
    ref1 = _reference(pos1, neg1)
    assert jnp.allclose(out1, ref1, rtol=1e-5, atol=1e-5), (out1, ref1)

    # Case 2: multi-tile grid + 2-way core split + ghost tile + tail-row mask
    # (40 rows with a forced 16-row tile -> 3 row tiles over 2 "cores").
    K2 = 40
    pos2_ = jax.random.normal(keys[2], (B,), dtype=jnp.float32)
    neg2_ = jax.random.normal(keys[3], (K2, B), dtype=jnp.float32)
    out2 = jax.block_until_ready(bpr_drug_loss(pos2_, neg2_, row_tile=16))
    ref2 = _reference(pos2_, neg2_)
    assert jnp.allclose(out2, ref2, rtol=1e-5, atol=1e-5), (out2, ref2)

    # Case 3: scalar-like pos (1,) broadcast over everything.
    pos3 = jax.random.normal(keys[4], (1,), dtype=jnp.float32)
    neg3 = jax.random.normal(keys[5], (K, B), dtype=jnp.float32)
    out3 = jax.block_until_ready(bpr_drug_loss(pos3, neg3))
    ref3 = _reference(pos3, neg3)
    assert jnp.allclose(out3, ref3, rtol=1e-5, atol=1e-5), (out3, ref3)

    # Case 4: bf16 inputs (low-precision VPU path on v6e+, f32 on v5e).
    pos4 = jax.random.normal(keys[6], (B,), dtype=jnp.bfloat16)
    neg4 = jax.random.normal(keys[7], (24, B), dtype=jnp.bfloat16)
    out4 = jax.block_until_ready(bpr_drug_loss(pos4, neg4))
    ref4 = _reference(pos4, neg4)
    assert jnp.allclose(out4, ref4, rtol=2e-2, atol=2e-2), (out4, ref4)

    print("KERNEL_OK")
</pallas_src>

<mosaic_0001>
module attributes {stable_mosaic.version = 11 : i64} {
  func.func @_bpr_loss_kernel(%arg0: i32, %arg1: i32, %arg2: i32, %arg3: memref<1x128xf32, #tpu.memory_space<vmem>>, %arg4: memref<8x128xf32, #tpu.memory_space<vmem>>, %arg5: memref<1x8x128xf32, #tpu.memory_space<vmem>>, %arg6: memref<8x128xf32, #tpu.memory_space<vmem>>) attributes {dimension_semantics = [#tpu.dimension_semantics<parallel>, #tpu.dimension_semantics<arbitrary>, #tpu.dimension_semantics<arbitrary>], iteration_bounds = array<i64: 1, 1, 1>, scalar_prefetch = 0 : i64, scratch_operands = 1 : i64, tpu.core_type = #tpu.core_type<tc>, window_params = [{transform_indices = @transform_0, window_bounds = array<i64: 1, 128>}, {transform_indices = @transform_1, window_bounds = array<i64: 8, 128>}, {transform_indices = @transform_2, window_bounds = array<i64: 1, 8, 128>}]} {
    %c0_i32 = arith.constant 0 : i32
    %0 = arith.cmpi eq, %arg1, %c0_i32 : i32
    %c0_i32_0 = arith.constant 0 : i32
    %1 = arith.cmpi eq, %arg2, %c0_i32_0 : i32
    %2 = arith.andi %0, %1 : i1
    %3 = arith.extui %2 : i1 to i32
    %c0_i32_1 = arith.constant 0 : i32
    %4 = arith.cmpi ne, %3, %c0_i32_1 : i32
    scf.if %4 {
      %cst_14 = arith.constant 0.000000e+00 : f32
      %23 = vector.broadcast %cst_14 : f32 to vector<8x128xf32>
      %c0_15 = arith.constant 0 : index
      %c0_16 = arith.constant 0 : index
      %24 = vector.load %arg6[%c0_15, %c0_16] : memref<8x128xf32, #tpu.memory_space<vmem>>, vector<8x128xf32>
      tpu.vector_store %arg6[%c0_15, %c0_16], %23 {strides = array<i32>} : memref<8x128xf32, #tpu.memory_space<vmem>>, vector<8x128xf32>,
    } else {
    }
    %c0 = arith.constant 0 : index
    %c0_2 = arith.constant 0 : index
    %5 = vector.load %arg4[%c0, %c0_2] : memref<8x128xf32, #tpu.memory_space<vmem>>, vector<8x128xf32>
    %c0_3 = arith.constant 0 : index
    %c0_4 = arith.constant 0 : index
    %6 = vector.load %arg3[%c0_3, %c0_4] : memref<1x128xf32, #tpu.memory_space<vmem>>, vector<1x128xf32>
    %cst = arith.constant 1.500000e+00 : f32
    %7 = vector.broadcast %cst : f32 to vector<1x128xf32>
    %8 = arith.subf %7, %6 : vector<1x128xf32>
    %9 = vector.broadcast %8 : vector<1x128xf32> to vector<8x128xf32>
    %10 = arith.addf %9, %5 : vector<8x128xf32>
    %cst_5 = arith.constant 0.000000e+00 : f32
    %11 = vector.broadcast %cst_5 : f32 to vector<8x128xf32>
    %12 = arith.maximumf %10, %11 : vector<8x128xf32>
    %13 = vector.shape_cast %12 : vector<8x128xf32> to vector<1x8x128xf32>
    %cst_6 = arith.constant dense<0.000000e+00> : vector<8x128xf32>
    %14 = vector.multi_reduction <add>, %13, %cst_6 [0] : vector<1x8x128xf32> to vector<8x128xf32>
    %c0_7 = arith.constant 0 : index
    %c0_8 = arith.constant 0 : index
    %15 = vector.load %arg6[%c0_7, %c0_8] : memref<8x128xf32, #tpu.memory_space<vmem>>, vector<8x128xf32>
    %16 = arith.addf %15, %14 : vector<8x128xf32>
    %c0_9 = arith.constant 0 : index
    %c0_10 = arith.constant 0 : index
    %17 = vector.load %arg6[%c0_9, %c0_10] : memref<8x128xf32, #tpu.memory_space<vmem>>, vector<8x128xf32>
    tpu.vector_store %arg6[%c0_9, %c0_10], %16 {strides = array<i32>} : memref<8x128xf32, #tpu.memory_space<vmem>>, vector<8x128xf32>,
    %c0_i32_11 = arith.constant 0 : i32
    %18 = arith.cmpi eq, %arg1, %c0_i32_11 : i32
    %c0_i32_12 = arith.constant 0 : i32
    %19 = arith.cmpi eq, %arg2, %c0_i32_12 : i32
    %20 = arith.andi %18, %19 : i1
    %21 = arith.extui %20 : i1 to i32
    %c0_i32_13 = arith.constant 0 : i32
    %22 = arith.cmpi ne, %21, %c0_i32_13 : i32
    scf.if %22 {
      %c0_14 = arith.constant 0 : index
      %c0_15 = arith.constant 0 : index
      %23 = vector.load %arg6[%c0_14, %c0_15] : memref<8x128xf32, #tpu.memory_space<vmem>>, vector<8x128xf32>
      %24 = vector.shape_cast %23 : vector<8x128xf32> to vector<1x8x128xf32>
      %cst_16 = arith.constant dense<0.000000e+00> : vector<1xf32>
      %25 = vector.multi_reduction <add>, %24, %cst_16 [1, 2] : vector<1x8x128xf32> to vector<1xf32>
      %26 = vector.shape_cast %25 : vector<1xf32> to vector<1x1x1xf32>
      %27 = vector.extract %26[0, 0, 0] : f32 from vector<1x1x1xf32>
      %cst_17 = arith.constant 9.765625E-4 : f32
      %28 = arith.mulf %27, %cst_17 : f32
      %29 = vector.broadcast %28 : f32 to vector<1x8x128xf32>
      %c0_18 = arith.constant 0 : index
      %c0_19 = arith.constant 0 : index
      %c0_20 = arith.constant 0 : index
      %30 = vector.load %arg5[%c0_18, %c0_19, %c0_20] : memref<1x8x128xf32, #tpu.memory_space<vmem>>, vector<1x8x128xf32>
      tpu.vector_store %arg5[%c0_18, %c0_19, %c0_20], %29 {strides = array<i32>} : memref<1x8x128xf32, #tpu.memory_space<vmem>>, vector<1x8x128xf32>,
    } else {
    }
    return
  }
  func.func @transform_0(%arg0: i32, %arg1: i32, %arg2: i32) -> (i32, i32) {
    %c0_i32 = arith.constant 0 : i32
    %c0_i32_0 = arith.constant 0 : i32
    return %c0_i32, %arg2 : i32, i32
  }
  func.func @transform_1(%arg0: i32, %arg1: i32, %arg2: i32) -> (i32, i32) {
    %c1_i32 = arith.constant 1 : i32
    %0 = arith.muli %arg0, %c1_i32 : i32
    %1 = arith.addi %0, %arg1 : i32
    %c0_i32 = arith.constant 0 : i32
    return %1, %arg2 : i32, i32
  }
  func.func @transform_2(%arg0: i32, %arg1: i32, %arg2: i32) -> (i32, i32, i32) {
    %c0_i32 = arith.constant 0 : i32
    %c0_i32_0 = arith.constant 0 : i32
    %c0_i32_1 = arith.constant 0 : i32
    return %arg0, %c0_i32, %c0_i32_0 : i32, i32, i32
  }
}

</mosaic_0001>

<llo_original>
// kernel: tpu_custom_call.1
$region0: #{tpu_custom_call.1}
  #allocation0 [shape = 'u32[]', space=smem, size = 0x4, offset = 0x4, fixed_abs, tag = 'smem constant byte address 0x4 - core index']
  #allocation1 [shape = 'u32[144,128]{1,0:T(1,128)}', space=vmem, size = 0x12000, scoped, tag = 'internal scratch']
  #allocation2 [shape = 'f32[8,128]{1,0:T(8,128)}', space=vmem, size = 0x1000, scoped, tag = 'scratch operand']
  %s0 = inlined_call_operand.hbm [shape: f32[1,128], index: 0, kind: input, shape index: {}]
  %s1 = inlined_call_operand.hbm [shape: f32[8,128], index: 1, kind: input, shape index: {}]
  %s2 = inlined_call_operand.hbm [shape: f32[1,8,128], index: 2, kind: output, shape index: {}]
  %s3 = sld [smem:[#allocation0]]
  $region34: #{tpu_custom_call.1} parent=0
    _
  %s5 = ssub.s32 1, %s3
  %s6 = scalar_select 0, %s5, %s3
  $region1: #{tpu_custom_call.1} parent=0
    #allocation3 [shape = 'u8[512]{0}', space=vmem, size = 0x400, scoped, tag = 'input window, operand 0, single buffered']
    #allocation4 [shape = 's32[1]{0}', space=sflag, size = 0x4, scoped, tag = 'scoped memory for tpu_custom_call.1']
    #allocation5 [shape = 's32[1]{0}', space=sflag, size = 0x4, scoped, tag = 'scoped memory for tpu_custom_call.1']
    #allocation6 [shape = 'u8[4096]{0}', space=vmem, size = 0x1000, scoped, tag = 'input window, operand 1, single buffered']
    #allocation7 [shape = 's32[1]{0}', space=sflag, size = 0x4, scoped, tag = 'scoped memory for tpu_custom_call.1']
    #allocation8 [shape = 'u8[4096]{0}', space=vmem, size = 0x1000, scoped, tag = 'output window, operand 0, single buffered']
    %7 = vsyncpa [#allocation4], 0
    %8 = vsyncpa [#allocation7], 0
    %9 = vsyncpa [#allocation5], 0
    // Predicated region
    $region2: #{tpu_custom_call.1} parent=1 // pred_check
      _
    $region3: #{tpu_custom_call.1} parent=1 // pred_check_branch
      %11 = sbr.rel (0) target = $region5
    $region4: #{tpu_custom_call.1} parent=1 // pred_region
      %s13 = ssub.s32 16, 16
      %14 = vsyncadd [#allocation4], %s13
      %s16 = sshll.u32 [#allocation3], 4
      %s17 = int_to_ptr.vmem [resolvable:$true] %s16
      %19 = dma.hbm_to_vmem [thread:$0]  %s0, 16, %s17, [#allocation4]
    $region5: #{tpu_custom_call.1} parent=1 // pred_fallthru
      _
    // Predicated region
    $region6: #{tpu_custom_call.1} parent=1 // pred_check
      _
    $region7: #{tpu_custom_call.1} parent=1 // pred_check_branch
      %21 = sbr.rel (0) target = $region9
    $region8: #{tpu_custom_call.1} parent=1 // pred_region
      %s22 = sadd.s32 0, 0
      %s24 = ssub.s32 128, 128
      %25 = vsyncadd [#allocation7], %s24
      %s26 = smul.addr %s22, 128
      %s27 = scalar_lea.hbm %s1, %s26
      %s29 = sshll.u32 [#allocation6], 4
      %s30 = int_to_ptr.vmem [resolvable:$true] %s29
      %32 = dma.hbm_to_vmem [thread:$0]  %s27, 128, %s30, [#allocation7]
    $region9: #{tpu_custom_call.1} parent=1 // pred_fallthru
      _
    // Predicated region
    $region10: #{tpu_custom_call.1} parent=1 // pred_check
      _
    $region11: #{tpu_custom_call.1} parent=1 // pred_check_branch
      %34 = sbr.rel (0) target = $region13
    $region12: #{tpu_custom_call.1} parent=1 // pred_region
      %35 = dma.done [#allocation4], 16
    $region13: #{tpu_custom_call.1} parent=1 // pred_fallthru
      _
    // Predicated region
    $region14: #{tpu_custom_call.1} parent=1 // pred_check
      _
    $region15: #{tpu_custom_call.1} parent=1 // pred_check_branch
      %37 = sbr.rel (0) target = $region17
    $region16: #{tpu_custom_call.1} parent=1 // pred_region
      %38 = dma.done [#allocation7], 128
    $region17: #{tpu_custom_call.1} parent=1 // pred_fallthru
      _
    %s39 = sadd.s32 0, 0
    %p40 = scmp.eq.s32.totalorder 0, 0
    %p41 = scmp.eq.s32.totalorder 0, 0
    %p42 = pnand %p40, %p41
    %p43 = pneg %p42
    // Predicated region
    $region18: #{tpu_custom_call.1} parent=1 // pred_check
      _
    $region19: #{tpu_custom_call.1} parent=1 // pred_check_branch
      %45 = sbr.rel (%p42) target = $region21
    $region20: #{tpu_custom_call.1} parent=1 // pred_region
      %46 = vst [vmem:[#allocation2] sm:$0xff] 0.0
    $region21: #{tpu_custom_call.1} parent=1 // pred_fallthru
      _
    %v47 = vld [vmem:[#allocation6] sm:$0xff]
    %v48 = vld [vmem:[#allocation3] sm:$0x1]
    %v49 = vsub.f32 1.5, %v48
    %v51 = vlaneseq
    %v52 = vshrl.u32 %v51, 7
    %v53 = vsub.s32 0, %v52
    %v54 = vrot.slane %v49, %v53
    %v56 = vadd.f32 %v54, %v47
    %v57 = vmax.f32 %v56, 0.0
    %v58 = vadd.f32 %v57, 0.0
    %v59 = vld [vmem:[#allocation2] sm:$0xff]
    %v60 = vadd.f32 %v59, %v58
    %61 = vst [vmem:[#allocation2] sm:$0xff] %v60
    // Predicated region
    $region22: #{tpu_custom_call.1} parent=1 // pred_check
      _
    $region23: #{tpu_custom_call.1} parent=1 // pred_check_branch
      %63 = sbr.rel (%p42) target = $region25
    $region24: #{tpu_custom_call.1} parent=1 // pred_region
      %v64 = vld [vmem:[#allocation2] sm:$0xff]
      %65 = vadd.xlane.f32.xlu0 %v64
      %v66 = vpop.xlane.xlu0 %65
      %v67 = vrot.slane %v66, 4
      %v68 = vadd.f32 %v66, %v67
      %v69 = vrot.slane %v68, 2
      %v70 = vadd.f32 %v68, %v69
      %v71 = vrot.slane %v70, 1
      %v72 = vadd.f32 %v70, %v71
      %s73 = vtos %v72
      %s74 = smul.f32 %s73, 0.0009765625
      %v75 = vstv %s74
      %76 = vst [vmem:[#allocation8] sm:$0xff] %v75
    $region25: #{tpu_custom_call.1} parent=1 // pred_fallthru
      _
    // Predicated region
    $region26: #{tpu_custom_call.1} parent=1 // pred_check
      _
    $region27: #{tpu_custom_call.1} parent=1 // pred_check_branch
      %78 = sbr.rel (0) target = $region29
    $region28: #{tpu_custom_call.1} parent=1 // pred_region
      %s80 = ssub.s32 128, 128
      %81 = vsyncadd [#allocation5], %s80
      %s83 = sshll.u32 [#allocation8], 4
      %s84 = int_to_ptr.vmem [resolvable:$true] %s83
      %86 = dma.vmem_to_hbm [thread:$0]  %s84, 128, %s2, [#allocation5]
    $region29: #{tpu_custom_call.1} parent=1 // pred_fallthru
      _
    // Predicated region
    $region30: #{tpu_custom_call.1} parent=1 // pred_check
      _
    $region31: #{tpu_custom_call.1} parent=1 // pred_check_branch
      %88 = sbr.rel (0) target = $region33
    $region32: #{tpu_custom_call.1} parent=1 // pred_region
      %89 = dma.done [#allocation5], 128
    $region33: #{tpu_custom_call.1} parent=1 // pred_fallthru
      _
    %90 = vsyncpa [#allocation4], 1
    %91 = vsyncpa [#allocation7], 1
    %92 = vsyncpa [#allocation5], 1

</llo_original>
